<compile_context>
chip_gen: v7x
topology: tpu7x:2x2x1
jax: 0.10.0
libtpu: 0.0.40
codegen_flags: <defaults>
</compile_context>

<pallas_src>
import jax
import jax.numpy as jnp
from jax.experimental import pallas as pl
from jax.experimental.pallas import tpu as pltpu


def _round_up(n, m):
    return ((n + m - 1) // m) * m


def _pick_tile_rows(rows, max_rows):
    """Folded-row tile size.

    Small problems: one tile covering the whole folded batch (block == full
    array, so the (8,128) divisibility rule is trivially satisfied).  Larger
    problems: at least 2 grid steps (v7x megacore sharding), capped at max_rows
    (== 4*max_rows batch rows per step) to amortize per-grid-step overhead
    while staying far inside VMEM on every generation (incl. v7x's 64 MiB).
    """
    if rows <= 64:
        return rows
    return min(max_rows, _round_up((rows + 1) // 2, 8))


def mlp_kernel(x_ref, w1_ref, b1_ref, w2_ref, b2_ref, w3_ref, b3_ref, o_ref):
    # x arrives as f32 straight from HBM (read exactly once); cast to bf16 here,
    # right before the first MXU dot.
    x = x_ref[...].astype(jnp.bfloat16)
    # Layer 1: block-diagonal folded Linear (K = fold*in_dims = 128 lanes),
    # f32 MXU accumulate, f32 bias + ReLU.
    h = jnp.dot(x, w1_ref[...], preferred_element_type=jnp.float32)
    h = jnp.maximum(h + b1_ref[...], 0.0)
    # Layer 2: Linear + ReLU.  (nn.Dropout(p=0.2) is identity in eval mode.)
    h = jnp.dot(h.astype(jnp.bfloat16), w2_ref[...],
                preferred_element_type=jnp.float32)
    h = jnp.maximum(h + b2_ref[...], 0.0)
    # Output head: folded block-diagonal matmul -> (tile_rows, fold*out_dims).
    out = jnp.dot(h.astype(jnp.bfloat16), w3_ref[...],
                  preferred_element_type=jnp.float32)
    o_ref[...] = (out + b3_ref[...]).astype(o_ref.dtype)


def mlp_forward(x, params, *, max_tile_rows=1024):
    """Fused MLP forward. x: (B, in_dims) float32. Returns (B, out_dims) float32."""
    w1, b1, w2, b2, w3, b3 = params
    B, in_dims = x.shape
    out_dims = w3.shape[1]

    # ---- batch fold: pack `fold` batch rows per 128-lane row -----------------
    fold = max(1, 128 // in_dims)
    pad = (-B) % fold
    if pad:
        # Only batches that are not a multiple of `fold` pay this extra copy.
        x = jnp.pad(x, ((0, pad), (0, 0)))
    Bp = B + pad
    rows = Bp // fold
    x_fold = x.reshape(rows, fold * in_dims)      # contiguous => layout-free view

    # Tiny block-diagonal folded weights / tiled biases (negligible prep cost).
    eye = jnp.eye(fold, dtype=jnp.float32)
    w1_bd = jnp.kron(eye, w1.astype(jnp.float32)).astype(jnp.bfloat16)
    w2_bd = jnp.kron(eye, w2.astype(jnp.float32)).astype(jnp.bfloat16)
    w3_bd = jnp.kron(eye, w3.astype(jnp.float32)).astype(jnp.bfloat16)
    b1_f = jnp.tile(b1.astype(jnp.float32), (1, fold))
    b2_f = jnp.tile(b2.astype(jnp.float32), (1, fold))
    b3_f = jnp.tile(b3.astype(jnp.float32), (1, fold))

    # ---- batch tiling: ragged cdiv grid, no padding of the big x array -------
    tile_rows = _pick_tile_rows(rows, max_tile_rows)
    num_tiles = pl.cdiv(rows, tile_rows)

    def _resident(a):
        # Constant block index -> stays VMEM-resident across grid steps.
        return pl.BlockSpec(a.shape, lambda i: (0, 0))

    fi, fh1 = fold * in_dims, w1_bd.shape[1]
    fh2, fo = w2_bd.shape[1], w3_bd.shape[1]
    flops = 2 * rows * (fi * fh1 + fh1 * fh2 + fh2 * fo)
    bytes_accessed = (x_fold.size * 4                               # f32 x, read once
                      + (w1_bd.size + w2_bd.size + w3_bd.size) * 2  # bf16 weights
                      + (b1_f.size + b2_f.size + b3_f.size) * 4
                      + rows * fo * 4)                              # f32 output write

    out_fold = pl.pallas_call(
        mlp_kernel,
        out_shape=jax.ShapeDtypeStruct((rows, fo), jnp.float32),
        grid=(num_tiles,),
        in_specs=[
            pl.BlockSpec((tile_rows, fi), lambda i: (i, 0)),   # pipelined x tile
            _resident(w1_bd), _resident(b1_f),
            _resident(w2_bd), _resident(b2_f),
            _resident(w3_bd), _resident(b3_f),
        ],
        out_specs=pl.BlockSpec((tile_rows, fo), lambda i: (i, 0)),
        compiler_params=pltpu.CompilerParams(
            dimension_semantics=("parallel",),       # megacore sharding on v7x
            vmem_limit_bytes=32 * 1024 * 1024,
        ),
        cost_estimate=pl.CostEstimate(
            flops=flops, transcendentals=0, bytes_accessed=bytes_accessed),
    )(x_fold, w1_bd, b1_f, w2_bd, b2_f, w3_bd, b3_f)

    return out_fold.reshape(Bp, out_dims)[:B]


def init_params(key, in_dims, hidden, out_dims):
    """Deterministic parameter init. Weights shaped (fan_in, fan_out)."""
    dims = [in_dims, *hidden, out_dims]
    params = []
    for d_in, d_out in zip(dims[:-1], dims[1:]):
        kw, kb, key = jax.random.split(key, 3)
        bound = 1.0 / (d_in ** 0.5)  # matches nn.Linear default init range
        w = jax.random.uniform(kw, (d_in, d_out), jnp.float32, -bound, bound)
        b = jax.random.uniform(kb, (1, d_out), jnp.float32, -bound, bound)
        params += [w, b]
    return tuple(params)


def mlp_reference(x, params):
    """Pure-JAX reference with the same bf16-operand / f32-accumulate precision."""
    w1, b1, w2, b2, w3, b3 = params
    h = jnp.dot(x.astype(jnp.bfloat16), w1.astype(jnp.bfloat16),
                preferred_element_type=jnp.float32)
    h = jnp.maximum(h + b1, 0.0)
    h = jnp.dot(h.astype(jnp.bfloat16), w2.astype(jnp.bfloat16),
                preferred_element_type=jnp.float32)
    h = jnp.maximum(h + b2, 0.0)
    out = jnp.dot(h.astype(jnp.bfloat16), w3.astype(jnp.bfloat16),
                  preferred_element_type=jnp.float32)
    return out + b3


if __name__ == "__main__":
    in_dims, hidden, out_dims = 32, [32, 16], 1  # layers=[1.0, 0.5] * in_dims
    key = jax.random.PRNGKey(0)
    kx1, kx2, kx3, kp = jax.random.split(key, 4)
    params = init_params(kp, in_dims, hidden, out_dims)

    cases = (
        ("small", kx1, 8),       # single-tile path (block == full folded array)
        ("ragged", kx2, 1003),   # B % fold != 0 + partial last grid block
        ("tiled", kx3, 2000),    # multi-step pipelined batch grid
    )
    for name, kx, B in cases:
        x = jax.random.normal(kx, (B, in_dims), jnp.float32)
        out = jax.block_until_ready(mlp_forward(x, params))
        ref = mlp_reference(x, params)
        assert out.shape == (B, out_dims), (name, out.shape)
        assert jnp.allclose(out, ref, atol=2e-3, rtol=2e-3), f"{name} mismatch"

    print("KERNEL_OK")
</pallas_src>

<mosaic_0001>
module attributes {stable_mosaic.version = 11 : i64} {
  func.func @mlp_kernel(%arg0: i32, %arg1: memref<2x128xf32, #tpu.memory_space<vmem>>, %arg2: memref<128x128xbf16, #tpu.memory_space<vmem>>, %arg3: memref<1x128xf32, #tpu.memory_space<vmem>>, %arg4: memref<128x64xbf16, #tpu.memory_space<vmem>>, %arg5: memref<1x64xf32, #tpu.memory_space<vmem>>, %arg6: memref<64x4xbf16, #tpu.memory_space<vmem>>, %arg7: memref<1x4xf32, #tpu.memory_space<vmem>>, %arg8: memref<2x4xf32, #tpu.memory_space<vmem>>) attributes {dimension_semantics = [#tpu.dimension_semantics<parallel>], iteration_bounds = array<i64: 1>, scalar_prefetch = 0 : i64, scratch_operands = 0 : i64, tpu.core_type = #tpu.core_type<tc>, window_params = [{transform_indices = @transform_0, window_bounds = array<i64: 2, 128>}, {pipeline_mode = #tpu.pipeline_mode<synchronous>, transform_indices = @transform_1, window_bounds = array<i64: 128, 128>}, {pipeline_mode = #tpu.pipeline_mode<synchronous>, transform_indices = @transform_2, window_bounds = array<i64: 1, 128>}, {pipeline_mode = #tpu.pipeline_mode<synchronous>, transform_indices = @transform_3, window_bounds = array<i64: 128, 64>}, {pipeline_mode = #tpu.pipeline_mode<synchronous>, transform_indices = @transform_4, window_bounds = array<i64: 1, 64>}, {pipeline_mode = #tpu.pipeline_mode<synchronous>, transform_indices = @transform_5, window_bounds = array<i64: 64, 4>}, {pipeline_mode = #tpu.pipeline_mode<synchronous>, transform_indices = @transform_6, window_bounds = array<i64: 1, 4>}, {transform_indices = @transform_7, window_bounds = array<i64: 2, 4>}]} {
    %c0 = arith.constant 0 : index
    %c0_0 = arith.constant 0 : index
    %0 = vector.load %arg1[%c0, %c0_0] : memref<2x128xf32, #tpu.memory_space<vmem>>, vector<2x128xf32>
    %1 = arith.truncf %0 : vector<2x128xf32> to vector<2x128xbf16>
    %c0_1 = arith.constant 0 : index
    %c0_2 = arith.constant 0 : index
    %2 = vector.load %arg2[%c0_1, %c0_2] : memref<128x128xbf16, #tpu.memory_space<vmem>>, vector<128x128xbf16>
    %cst = arith.constant dense<0.000000e+00> : vector<2x128xf32>
    %3 = tpu.matmul %1, %2, %cst {dimension_numbers = #tpu.dot_dimension_numbers<[1], [0], [0], [1], [0, 0, 1, 1], [], []>} : vector<2x128xbf16>, vector<128x128xbf16>, vector<2x128xf32> -> vector<2x128xf32>
    %c0_3 = arith.constant 0 : index
    %c0_4 = arith.constant 0 : index
    %4 = vector.load %arg3[%c0_3, %c0_4] : memref<1x128xf32, #tpu.memory_space<vmem>>, vector<1x128xf32>
    %5 = vector.broadcast %4 : vector<1x128xf32> to vector<2x128xf32>
    %6 = arith.addf %3, %5 : vector<2x128xf32>
    %cst_5 = arith.constant 0.000000e+00 : f32
    %7 = vector.broadcast %cst_5 : f32 to vector<2x128xf32>
    %8 = arith.maximumf %6, %7 : vector<2x128xf32>
    %9 = arith.truncf %8 : vector<2x128xf32> to vector<2x128xbf16>
    %c0_6 = arith.constant 0 : index
    %c0_7 = arith.constant 0 : index
    %10 = vector.load %arg4[%c0_6, %c0_7] : memref<128x64xbf16, #tpu.memory_space<vmem>>, vector<128x64xbf16>
    %cst_8 = arith.constant dense<0.000000e+00> : vector<2x64xf32>
    %11 = tpu.matmul %9, %10, %cst_8 {dimension_numbers = #tpu.dot_dimension_numbers<[1], [0], [0], [1], [0, 0, 1, 1], [], []>} : vector<2x128xbf16>, vector<128x64xbf16>, vector<2x64xf32> -> vector<2x64xf32>
    %c0_9 = arith.constant 0 : index
    %c0_10 = arith.constant 0 : index
    %12 = vector.load %arg5[%c0_9, %c0_10] : memref<1x64xf32, #tpu.memory_space<vmem>>, vector<1x64xf32>
    %13 = vector.broadcast %12 : vector<1x64xf32> to vector<2x64xf32>
    %14 = arith.addf %11, %13 : vector<2x64xf32>
    %cst_11 = arith.constant 0.000000e+00 : f32
    %15 = vector.broadcast %cst_11 : f32 to vector<2x64xf32>
    %16 = arith.maximumf %14, %15 : vector<2x64xf32>
    %17 = arith.truncf %16 : vector<2x64xf32> to vector<2x64xbf16>
    %c0_12 = arith.constant 0 : index
    %c0_13 = arith.constant 0 : index
    %18 = vector.load %arg6[%c0_12, %c0_13] : memref<64x4xbf16, #tpu.memory_space<vmem>>, vector<64x4xbf16>
    %cst_14 = arith.constant dense<0.000000e+00> : vector<2x4xf32>
    %19 = tpu.matmul %17, %18, %cst_14 {dimension_numbers = #tpu.dot_dimension_numbers<[1], [0], [0], [1], [0, 0, 1, 1], [], []>} : vector<2x64xbf16>, vector<64x4xbf16>, vector<2x4xf32> -> vector<2x4xf32>
    %c0_15 = arith.constant 0 : index
    %c0_16 = arith.constant 0 : index
    %20 = vector.load %arg7[%c0_15, %c0_16] : memref<1x4xf32, #tpu.memory_space<vmem>>, vector<1x4xf32>
    %21 = vector.broadcast %20 : vector<1x4xf32> to vector<2x4xf32>
    %22 = arith.addf %19, %21 : vector<2x4xf32>
    %c0_17 = arith.constant 0 : index
    %c0_18 = arith.constant 0 : index
    %23 = vector.load %arg8[%c0_17, %c0_18] : memref<2x4xf32, #tpu.memory_space<vmem>>, vector<2x4xf32>
    tpu.vector_store %arg8[%c0_17, %c0_18], %22 {strides = array<i32>} : memref<2x4xf32, #tpu.memory_space<vmem>>, vector<2x4xf32>,
    return
  }
  func.func @transform_0(%arg0: i32) -> (i32, i32) {
    %c0_i32 = arith.constant 0 : i32
    %c0_i32_0 = arith.constant 0 : i32
    return %arg0, %c0_i32 : i32, i32
  }
  func.func @transform_1(%arg0: i32) -> (i32, i32) {
    %c0_i32 = arith.constant 0 : i32
    %c0_i32_0 = arith.constant 0 : i32
    %c0_i32_1 = arith.constant 0 : i32
    return %c0_i32, %c0_i32_0 : i32, i32
  }
  func.func @transform_2(%arg0: i32) -> (i32, i32) {
    %c0_i32 = arith.constant 0 : i32
    %c0_i32_0 = arith.constant 0 : i32
    %c0_i32_1 = arith.constant 0 : i32
    return %c0_i32, %c0_i32_0 : i32, i32
  }
  func.func @transform_3(%arg0: i32) -> (i32, i32) {
    %c0_i32 = arith.constant 0 : i32
    %c0_i32_0 = arith.constant 0 : i32
    %c0_i32_1 = arith.constant 0 : i32
    return %c0_i32, %c0_i32_0 : i32, i32
  }
  func.func @transform_4(%arg0: i32) -> (i32, i32) {
    %c0_i32 = arith.constant 0 : i32
    %c0_i32_0 = arith.constant 0 : i32
    %c0_i32_1 = arith.constant 0 : i32
    return %c0_i32, %c0_i32_0 : i32, i32
  }
  func.func @transform_5(%arg0: i32) -> (i32, i32) {
    %c0_i32 = arith.constant 0 : i32
    %c0_i32_0 = arith.constant 0 : i32
    %c0_i32_1 = arith.constant 0 : i32
    return %c0_i32, %c0_i32_0 : i32, i32
  }
  func.func @transform_6(%arg0: i32) -> (i32, i32) {
    %c0_i32 = arith.constant 0 : i32
    %c0_i32_0 = arith.constant 0 : i32
    %c0_i32_1 = arith.constant 0 : i32
    return %c0_i32, %c0_i32_0 : i32, i32
  }
  func.func @transform_7(%arg0: i32) -> (i32, i32) {
    %c0_i32 = arith.constant 0 : i32
    %c0_i32_0 = arith.constant 0 : i32
    return %arg0, %c0_i32 : i32, i32
  }
}

</mosaic_0001>

<llo_original>
// kernel: tpu_custom_call.1
$region0: #{tpu_custom_call.1}
  #allocation0 [shape = 'u32[]', space=smem, size = 0x4, offset = 0x4, fixed_abs, tag = 'smem constant byte address 0x4 - core index']
  #allocation1 [shape = 'u32[144,128]{1,0:T(1,128)}', space=vmem, size = 0x12000, scoped, tag = 'internal scratch']
  %s0 = inlined_call_operand.vmem [shape: f32[2,128], index: 0, kind: input, shape index: {}]
  %s1 = inlined_call_operand.vmem [shape: bf16[128,128], index: 1, kind: input, shape index: {}]
  %s2 = inlined_call_operand.vmem [shape: f32[1,128], index: 2, kind: input, shape index: {}]
  %s3 = inlined_call_operand.vmem [shape: bf16[128,64], index: 3, kind: input, shape index: {}]
  %s4 = inlined_call_operand.vmem [shape: f32[1,64], index: 4, kind: input, shape index: {}]
  %s5 = inlined_call_operand.vmem [shape: bf16[64,4], index: 5, kind: input, shape index: {}]
  %s6 = inlined_call_operand.vmem [shape: f32[1,4], index: 6, kind: input, shape index: {}]
  %s7 = inlined_call_operand.hbm [shape: f32[2,4], index: 7, kind: output, shape index: {}]
  %s8 = sld [smem:[#allocation0]]
  $region38: #{tpu_custom_call.1} parent=0
    _
  %s10 = ssub.s32 1, %s8
  %s11 = scalar_select 0, %s10, %s8
  $region1: #{tpu_custom_call.1} parent=0
    #allocation2 [shape = 'u8[1024]{0}', space=vmem, size = 0x400, scoped, tag = 'output window, operand 0, single buffered']
    #allocation3 [shape = 's32[1]{0}', space=sflag, size = 0x4, scoped, tag = 'scoped memory for tpu_custom_call.1']
    %12 = vsyncpa [#allocation3], 0
    // Predicated region
    $region2: #{tpu_custom_call.1} parent=1 // pred_check
      _
    $region3: #{tpu_custom_call.1} parent=1 // pred_check_branch
      %14 = sbr.rel (0) target = $region5
    $region4: #{tpu_custom_call.1} parent=1 // pred_region
      _
    $region5: #{tpu_custom_call.1} parent=1 // pred_fallthru
      _
    // Predicated region
    $region6: #{tpu_custom_call.1} parent=1 // pred_check
      _
    $region7: #{tpu_custom_call.1} parent=1 // pred_check_branch
      %16 = sbr.rel (0) target = $region9
    $region8: #{tpu_custom_call.1} parent=1 // pred_region
      _
    $region9: #{tpu_custom_call.1} parent=1 // pred_fallthru
      _
    // Predicated region
    $region10: #{tpu_custom_call.1} parent=1 // pred_check
      _
    $region11: #{tpu_custom_call.1} parent=1 // pred_check_branch
      %18 = sbr.rel (0) target = $region13
    $region12: #{tpu_custom_call.1} parent=1 // pred_region
      _
    $region13: #{tpu_custom_call.1} parent=1 // pred_fallthru
      _
    // Predicated region
    $region14: #{tpu_custom_call.1} parent=1 // pred_check
      _
    $region15: #{tpu_custom_call.1} parent=1 // pred_check_branch
      %20 = sbr.rel (0) target = $region17
    $region16: #{tpu_custom_call.1} parent=1 // pred_region
      _
    $region17: #{tpu_custom_call.1} parent=1 // pred_fallthru
      _
    // Predicated region
    $region18: #{tpu_custom_call.1} parent=1 // pred_check
      _
    $region19: #{tpu_custom_call.1} parent=1 // pred_check_branch
      %22 = sbr.rel (0) target = $region21
    $region20: #{tpu_custom_call.1} parent=1 // pred_region
      _
    $region21: #{tpu_custom_call.1} parent=1 // pred_fallthru
      _
    // Predicated region
    $region22: #{tpu_custom_call.1} parent=1 // pred_check
      _
    $region23: #{tpu_custom_call.1} parent=1 // pred_check_branch
      %24 = sbr.rel (0) target = $region25
    $region24: #{tpu_custom_call.1} parent=1 // pred_region
      _
    $region25: #{tpu_custom_call.1} parent=1 // pred_fallthru
      _
    // Predicated region
    $region26: #{tpu_custom_call.1} parent=1 // pred_check
      _
    $region27: #{tpu_custom_call.1} parent=1 // pred_check_branch
      %26 = sbr.rel (0) target = $region29
    $region28: #{tpu_custom_call.1} parent=1 // pred_region
      _
    $region29: #{tpu_custom_call.1} parent=1 // pred_fallthru
      _
    %v28 = vld [vmem:[%s0] sm:$0x3]
    %v29 = vpack.c.bf16 %v28, %v28
    %v30 = vld [vmem:[%s1] sm:$0xf]
    %v31 = vld [vmem:[%s1 + $0x4] sm:$0xf]
    %v32 = vld [vmem:[%s1 + $0x8] sm:$0xf]
    %v33 = vld [vmem:[%s1 + $0xc] sm:$0xf]
    %v34 = vld [vmem:[%s1 + $0x10] sm:$0xf]
    %v35 = vld [vmem:[%s1 + $0x14] sm:$0xf]
    %v36 = vld [vmem:[%s1 + $0x18] sm:$0xf]
    %v37 = vld [vmem:[%s1 + $0x1c] sm:$0xf]
    %v38 = vld [vmem:[%s1 + $0x20] sm:$0xf]
    %v39 = vld [vmem:[%s1 + $0x24] sm:$0xf]
    %v40 = vld [vmem:[%s1 + $0x28] sm:$0xf]
    %v41 = vld [vmem:[%s1 + $0x2c] sm:$0xf]
    %v42 = vld [vmem:[%s1 + $0x30] sm:$0xf]
    %v43 = vld [vmem:[%s1 + $0x34] sm:$0xf]
    %v44 = vld [vmem:[%s1 + $0x38] sm:$0xf]
    %v45 = vld [vmem:[%s1 + $0x3c] sm:$0xf]
    %v46 = vld [vmem:[%s2] sm:$0x1]
    %v48 = vlaneseq
    %v49 = vshrl.u32 %v48, 7
    %v50 = vsub.s32 0, %v49
    %v51 = vrot.slane %v46, %v50
    %v69 = vunpack.c.l.b16 %v30
    %v70 = vunpack.c.l.b16 %v31
    %v71 = vunpack.c.l.b16 %v32
    %v72 = vunpack.c.l.b16 %v33
    %v73 = vunpack.c.l.b16 %v34
    %v74 = vunpack.c.l.b16 %v35
    %v75 = vunpack.c.l.b16 %v36
    %v76 = vunpack.c.l.b16 %v37
    %v77 = vunpack.c.l.b16 %v38
    %v78 = vunpack.c.l.b16 %v39
    %v79 = vunpack.c.l.b16 %v40
    %v80 = vunpack.c.l.b16 %v41
    %v81 = vunpack.c.l.b16 %v42
    %v82 = vunpack.c.l.b16 %v43
    %v83 = vunpack.c.l.b16 %v44
    %v84 = vunpack.c.l.b16 %v45
    %v85 = vpack.c.b16 %v70, %v69
    %v86 = vpack.c.b16 %v72, %v71
    %v87 = vpack.c.b16 %v74, %v73
    %v88 = vpack.c.b16 %v76, %v75
    %v89 = vpack.c.b16 %v78, %v77
    %v90 = vpack.c.b16 %v80, %v79
    %v91 = vpack.c.b16 %v82, %v81
    %v92 = vpack.c.b16 %v84, %v83
    %101 = vmatprep.subr.bf16.mxu0 0
    %102 = vmatpush1.bf16.msra.mxu0 %v85
    %103 = vmatprep.subr.bf16.mxu0 0
    %104 = vmatpush1.bf16.msra.mxu0 %v86
    %105 = vmatprep.subr.bf16.mxu0 0
    %106 = vmatpush1.bf16.msra.mxu0 %v87
    %107 = vmatprep.subr.bf16.mxu0 0
    %108 = vmatpush1.bf16.msra.mxu0 %v88
    %109 = vmatprep.subr.bf16.mxu0 0
    %110 = vmatpush1.bf16.msra.mxu0 %v89
    %111 = vmatprep.subr.bf16.mxu0 0
    %112 = vmatpush1.bf16.msra.mxu0 %v90
    %113 = vmatprep.subr.bf16.mxu0 0
    %114 = vmatpush1.bf16.msra.mxu0 %v91
    %115 = vmatprep.subr.bf16.mxu0 0
    %116 = vmatpush1.bf16.msra.mxu0 %v92
    %117 = vmatprep.subr.bf16.mxu0 0
    %118 = vmatpush1.bf16.msra.mxu0 0
    %119 = vmatprep.subr.bf16.mxu0 0
    %120 = vmatpush1.bf16.msra.mxu0 0
    %121 = vmatprep.subr.bf16.mxu0 0
    %122 = vmatpush1.bf16.msra.mxu0 0
    %123 = vmatprep.subr.bf16.mxu0 0
    %124 = vmatpush1.bf16.msra.mxu0 0
    %125 = vmatprep.subr.bf16.mxu0 0
    %126 = vmatpush1.bf16.msra.mxu0 0
    %127 = vmatprep.subr.bf16.mxu0 0
    %128 = vmatpush1.bf16.msra.mxu0 0
    %129 = vmatprep.subr.bf16.mxu0 0
    %130 = vmatpush1.bf16.msra.mxu0 0
    %131 = vmatprep.subr.bf16.mxu0 0
    %132 = vmatpush1.bf16.msra.mxu0 0
    %133 = vmatprep.mubr.bf16.mxu0 0
    %134 = vmatmul.mubr.bf16.gmra.mrb[0].mxu0 %v29
    %v135 = vpop.f32.mrb[0].mxu0
    %v136 = vadd.f32 %v51, %v135
    %v137 = vpop.f32.mrb[0].mxu0
    %v138 = vpop.f32.mrb[0].mxu0
    %v139 = vpop.f32.mrb[0].mxu0
    %140 = vdwg.mxu0
    %v141 = vmax.f32 %v136, 0.0
    %v142 = vpack.c.bf16 %v141, %v141
    %v143 = vld [vmem:[%s3] sm:$0xf]
    %v144 = vld [vmem:[%s3 + $0x4] sm:$0xf]
    %v145 = vld [vmem:[%s3 + $0x8] sm:$0xf]
    %v146 = vld [vmem:[%s3 + $0xc] sm:$0xf]
    %v147 = vld [vmem:[%s3 + $0x10] sm:$0xf]
    %v148 = vld [vmem:[%s3 + $0x14] sm:$0xf]
    %v149 = vld [vmem:[%s3 + $0x18] sm:$0xf]
    %v150 = vld [vmem:[%s3 + $0x1c] sm:$0xf]
    %v151 = vld [vmem:[%s3 + $0x20] sm:$0xf]
    %v152 = vld [vmem:[%s3 + $0x24] sm:$0xf]
    %v153 = vld [vmem:[%s3 + $0x28] sm:$0xf]
    %v154 = vld [vmem:[%s3 + $0x2c] sm:$0xf]
    %v155 = vld [vmem:[%s3 + $0x30] sm:$0xf]
    %v156 = vld [vmem:[%s3 + $0x34] sm:$0xf]
    %v157 = vld [vmem:[%s3 + $0x38] sm:$0xf]
    %v158 = vld [vmem:[%s3 + $0x3c] sm:$0xf]
    %v159 = vld [vmem:[%s4] sm:$0x1]
    %v161 = vlaneseq
    %v162 = vshrl.u32 %v161, 7
    %v163 = vsub.s32 0, %v162
    %v164 = vrot.slane %v159, %v163
    %v182 = vunpack.c.l.b16 %v143
    %v183 = vunpack.c.l.b16 %v144
    %v184 = vunpack.c.l.b16 %v145
    %v185 = vunpack.c.l.b16 %v146
    %v186 = vunpack.c.l.b16 %v147
    %v187 = vunpack.c.l.b16 %v148
    %v188 = vunpack.c.l.b16 %v149
    %v189 = vunpack.c.l.b16 %v150
    %v190 = vunpack.c.l.b16 %v151
    %v191 = vunpack.c.l.b16 %v152
    %v192 = vunpack.c.l.b16 %v153
    %v193 = vunpack.c.l.b16 %v154
    %v194 = vunpack.c.l.b16 %v155
    %v195 = vunpack.c.l.b16 %v156
    %v196 = vunpack.c.l.b16 %v157
    %v197 = vunpack.c.l.b16 %v158
    %v198 = vpack.c.b16 %v183, %v182
    %v199 = vpack.c.b16 %v185, %v184
    %v200 = vpack.c.b16 %v187, %v186
    %v201 = vpack.c.b16 %v189, %v188
    %v202 = vpack.c.b16 %v191, %v190
    %v203 = vpack.c.b16 %v193, %v192
    %v204 = vpack.c.b16 %v195, %v194
    %v205 = vpack.c.b16 %v197, %v196
    %214 = vmatprep.subr.bf16.mxu0 0
    %215 = vmatpush1.bf16.msra.mxu0 %v198
    %216 = vmatprep.subr.bf16.mxu0 0
    %217 = vmatpush1.bf16.msra.mxu0 %v199
    %218 = vmatprep.subr.bf16.mxu0 0
    %219 = vmatpush1.bf16.msra.mxu0 %v200
    %220 = vmatprep.subr.bf16.mxu0 0
    %221 = vmatpush1.bf16.msra.mxu0 %v201
    %222 = vmatprep.subr.bf16.mxu0 0
    %223 = vmatpush1.bf16.msra.mxu0 %v202
    %224 = vmatprep.subr.bf16.mxu0 0
    %225 = vmatpush1.bf16.msra.mxu0 %v203
    %226 = vmatprep.subr.bf16.mxu0 0
    %227 = vmatpush1.bf16.msra.mxu0 %v204
    %228 = vmatprep.subr.bf16.mxu0 0
    %229 = vmatpush1.bf16.msra.mxu0 %v205
    %230 = vmatprep.subr.bf16.mxu0 0
    %231 = vmatpush1.bf16.msra.mxu0 0
    %232 = vmatprep.subr.bf16.mxu0 0
    %233 = vmatpush1.bf16.msra.mxu0 0
    %234 = vmatprep.subr.bf16.mxu0 0
    %235 = vmatpush1.bf16.msra.mxu0 0
    %236 = vmatprep.subr.bf16.mxu0 0
    %237 = vmatpush1.bf16.msra.mxu0 0
    %238 = vmatprep.subr.bf16.mxu0 0
    %239 = vmatpush1.bf16.msra.mxu0 0
    %240 = vmatprep.subr.bf16.mxu0 0
    %241 = vmatpush1.bf16.msra.mxu0 0
    %242 = vmatprep.subr.bf16.mxu0 0
    %243 = vmatpush1.bf16.msra.mxu0 0
    %244 = vmatprep.subr.bf16.mxu0 0
    %245 = vmatpush1.bf16.msra.mxu0 0
    %246 = vmatprep.mubr.bf16.mxu0 0
    %247 = vmatmul.mubr.bf16.gmra.mrb[0].mxu0 %v142
    %v248 = vpop.f32.mrb[0].mxu0
    %v249 = vadd.f32 %v164, %v248
    %v250 = vpop.f32.mrb[0].mxu0
    %v251 = vpop.f32.mrb[0].mxu0
    %v252 = vpop.f32.mrb[0].mxu0
    %253 = vdwg.mxu0
    %v254 = vmax.f32 %v249, 0.0
    %v255 = vpack.c.bf16 %v254, %v254
    %v256 = vld [vmem:[%s5] sm:$0xf]
    %v257 = vld [vmem:[%s5 + $0x4] sm:$0xf]
    %v258 = vld [vmem:[%s5 + $0x8] sm:$0xf]
    %v259 = vld [vmem:[%s5 + $0xc] sm:$0xf]
    %v260 = vld [vmem:[%s5 + $0x10] sm:$0xf]
    %v261 = vld [vmem:[%s5 + $0x14] sm:$0xf]
    %v262 = vld [vmem:[%s5 + $0x18] sm:$0xf]
    %v263 = vld [vmem:[%s5 + $0x1c] sm:$0xf]
    %v264 = vld [vmem:[%s6] sm:$0x1]
    %v266 = vlaneseq
    %v267 = vshrl.u32 %v266, 7
    %v268 = vsub.s32 0, %v267
    %v269 = vrot.slane %v264, %v268
    %v279 = vunpack.c.l.b16 %v256
    %v280 = vunpack.c.l.b16 %v257
    %v281 = vunpack.c.l.b16 %v258
    %v282 = vunpack.c.l.b16 %v259
    %v283 = vunpack.c.l.b16 %v260
    %v284 = vunpack.c.l.b16 %v261
    %v285 = vunpack.c.l.b16 %v262
    %v286 = vunpack.c.l.b16 %v263
    %v287 = vpack.c.b16 %v280, %v279
    %v288 = vpack.c.b16 %v282, %v281
    %v289 = vpack.c.b16 %v284, %v283
    %v290 = vpack.c.b16 %v286, %v285
    %vm295 = vcmask 523264
    %v297 = vsel %vm295, %v255, 0
    %299 = vmatprep.subr.bf16.mxu0 0
    %300 = vmatpush1.bf16.msra.mxu0 %v287
    %301 = vmatprep.subr.bf16.mxu0 0
    %302 = vmatpush1.bf16.msra.mxu0 %v288
    %303 = vmatprep.subr.bf16.mxu0 0
    %304 = vmatpush1.bf16.msra.mxu0 %v289
    %305 = vmatprep.subr.bf16.mxu0 0
    %306 = vmatpush1.bf16.msra.mxu0 %v290
    %307 = vmatprep.subr.bf16.mxu0 0
    %308 = vmatpush1.bf16.msra.mxu0 0
    %309 = vmatprep.subr.bf16.mxu0 0
    %310 = vmatpush1.bf16.msra.mxu0 0
    %311 = vmatprep.subr.bf16.mxu0 0
    %312 = vmatpush1.bf16.msra.mxu0 0
    %313 = vmatprep.subr.bf16.mxu0 0
    %314 = vmatpush1.bf16.msra.mxu0 0
    %315 = vmatprep.subr.bf16.mxu0 0
    %316 = vmatpush1.bf16.msra.mxu0 0
    %317 = vmatprep.subr.bf16.mxu0 0
    %318 = vmatpush1.bf16.msra.mxu0 0
    %319 = vmatprep.subr.bf16.mxu0 0
    %320 = vmatpush1.bf16.msra.mxu0 0
    %321 = vmatprep.subr.bf16.mxu0 0
    %322 = vmatpush1.bf16.msra.mxu0 0
    %323 = vmatprep.subr.bf16.mxu0 0
    %324 = vmatpush1.bf16.msra.mxu0 0
    %325 = vmatprep.subr.bf16.mxu0 0
    %326 = vmatpush1.bf16.msra.mxu0 0
    %327 = vmatprep.subr.bf16.mxu0 0
    %328 = vmatpush1.bf16.msra.mxu0 0
    %329 = vmatprep.subr.bf16.mxu0 0
    %330 = vmatpush1.bf16.msra.mxu0 0
    %331 = vmatprep.mubr.bf16.mxu0 0
    %332 = vmatmul.mubr.bf16.gmra.mrb[0].mxu0 %v297
    %v333 = vpop.f32.mrb[0].mxu0
    %v334 = vadd.f32 %v269, %v333
    %v335 = vpop.f32.mrb[0].mxu0
    %v336 = vpop.f32.mrb[0].mxu0
    %v337 = vpop.f32.mrb[0].mxu0
    %338 = vdwg.mxu0
    %vm339 = vcmask 25600
    %340 = vst.msk [vmem:[#allocation2] sm:$0x3] %vm339, %v334
    // Predicated region
    $region30: #{tpu_custom_call.1} parent=1 // pred_check
      _
    $region31: #{tpu_custom_call.1} parent=1 // pred_check_branch
      %342 = sbr.rel (0) target = $region33
    $region32: #{tpu_custom_call.1} parent=1 // pred_region
      %s344 = ssub.s32 32, 32
      %345 = vsyncadd [#allocation3], %s344
      %s347 = sshll.u32 [#allocation2], 4
      %s348 = int_to_ptr.vmem [resolvable:$true] %s347
      %350 = dma.vmem_to_hbm [thread:$0]  %s348, 32, %s7, [#allocation3]
    $region33: #{tpu_custom_call.1} parent=1 // pred_fallthru
      _
    // Predicated region
    $region34: #{tpu_custom_call.1} parent=1 // pred_check
      _
    $region35: #{tpu_custom_call.1} parent=1 // pred_check_branch
      %352 = sbr.rel (0) target = $region37
    $region36: #{tpu_custom_call.1} parent=1 // pred_region
      %353 = dma.done [#allocation3], 32
    $region37: #{tpu_custom_call.1} parent=1 // pred_fallthru
      _
    %354 = vsyncpa [#allocation3], 1

</llo_original>
